<compile_context>
chip_gen: v5e
topology: v5e:2x2
jax: 0.10.0
libtpu: 0.0.40
codegen_flags: <defaults>
</compile_context>

<pallas_src>
import jax
import jax.numpy as jnp
from jax import lax
from jax.experimental import pallas as pl
from jax.experimental.pallas import tpu as pltpu


def _round_up(n, m):
    return ((n + m - 1) // m) * m


def _skip_linear_kernel(x_ref, w_ref, b_ref, o_ref):
    # x_ref: (tm, Hp)   w_ref: (Hp, Hp) in nn.Linear (out, in) layout
    # b_ref: (1, Hp)    o_ref: (tm, Hp)
    x = x_ref[...]
    # Contract x's dim 1 against the weight's dim 1 (the "in" axis) so the MXU
    # consumes the nn.Linear layout directly -> x @ W^T with no wrapper transpose.
    y = lax.dot_general(
        x, w_ref[...],
        dimension_numbers=(((1,), (1,)), ((), ())),
        preferred_element_type=jnp.float32)
    # Fused f32 epilogue: residual skip + bias, one store.
    o_ref[...] = (x.astype(jnp.float32) + y
                  + b_ref[...].astype(jnp.float32)).astype(o_ref.dtype)


def skip_connection_linear(x, weight, bias, *, tm=512):
    """SkipConnection(nn.Linear(H, H)):  out = x + x @ W^T + b.

    x:      (B, S, H)  float32
    weight: (H, H)     nn.Linear (out_features, in_features) layout
    bias:   (H,)
    """
    B, S, H = x.shape
    assert weight.shape == (H, H) and bias.shape == (H,)
    M = B * S

    # Lane-dense padding: hidden axis to a multiple of 128 (vreg lane width);
    # row tile is a multiple of 8 sublanes; rows padded to a multiple of tm.
    Hp = _round_up(H, 128)
    tm = min(tm, _round_up(M, 8))
    Mp = _round_up(M, tm)

    x2d = x.reshape(M, H)
    if (Mp, Hp) != (M, H):
        x2d = jnp.pad(x2d, ((0, Mp - M), (0, Hp - H)))
    w_p = weight if Hp == H else jnp.pad(weight, ((0, Hp - H), (0, Hp - H)))
    b_p = bias if Hp == H else jnp.pad(bias, (0, Hp - H))
    b2d = b_p.reshape(1, Hp)

    grid = (Mp // tm,)
    cost = pl.CostEstimate(
        flops=2 * Mp * Hp * Hp + 2 * Mp * Hp,
        transcendentals=0,
        bytes_accessed=4 * (2 * Mp * Hp + Hp * Hp + Hp))

    out2d = pl.pallas_call(
        _skip_linear_kernel,
        out_shape=jax.ShapeDtypeStruct((Mp, Hp), x.dtype),
        grid_spec=pltpu.PrefetchScalarGridSpec(
            num_scalar_prefetch=0,
            grid=grid,
            in_specs=[
                # x tile: pipelined over the M grid axis.
                pl.BlockSpec((tm, Hp), lambda i: (i, 0)),
                # weight: constant index_map -> stays resident in VMEM.
                pl.BlockSpec((Hp, Hp), lambda i: (0, 0)),
                # bias row: resident.
                pl.BlockSpec((1, Hp), lambda i: (0, 0)),
            ],
            out_specs=pl.BlockSpec((tm, Hp), lambda i: (i, 0)),
        ),
        compiler_params=pltpu.CompilerParams(
            dimension_semantics=("parallel",)),
        cost_estimate=cost,
    )(x2d, w_p, b2d)

    if (Mp, Hp) != (M, H):
        out2d = out2d[:M, :H]
    return out2d.reshape(B, S, H)


if __name__ == "__main__":
    key = jax.random.PRNGKey(0)
    kx, kw, kb = jax.random.split(key, 3)

    B, S, H = 2, 8, 32  # batch=2, seq=8, hidden=32
    x = jax.random.normal(kx, (B, S, H), dtype=jnp.float32)

    # Deterministic nn.Linear-style init: U(-1/sqrt(H), 1/sqrt(H))
    bound = 1.0 / (H ** 0.5)
    weight = jax.random.uniform(kw, (H, H), minval=-bound, maxval=bound,
                                dtype=jnp.float32)
    bias = jax.random.uniform(kb, (H,), minval=-bound, maxval=bound,
                              dtype=jnp.float32)

    out = skip_connection_linear(x, weight, bias)
    out = jax.block_until_ready(out)

    # Reference check against plain JAX (same semantics as the PyTorch module).
    ref = x + (jnp.einsum("bsh,oh->bso", x, weight) + bias)
    assert jnp.allclose(out, ref, atol=1e-5, rtol=1e-5), "mismatch vs reference"

    print("KERNEL_OK")
</pallas_src>

<mosaic_0001>
module attributes {stable_mosaic.version = 11 : i64} {
  func.func @_skip_linear_kernel(%arg0: i32, %arg1: memref<16x128xf32, #tpu.memory_space<vmem>>, %arg2: memref<128x128xf32, #tpu.memory_space<vmem>>, %arg3: memref<1x128xf32, #tpu.memory_space<vmem>>, %arg4: memref<16x128xf32, #tpu.memory_space<vmem>>) attributes {dimension_semantics = [#tpu.dimension_semantics<parallel>], iteration_bounds = array<i64: 1>, scalar_prefetch = 0 : i64, scratch_operands = 0 : i64, tpu.core_type = #tpu.core_type<tc>, window_params = [{transform_indices = @transform_0, window_bounds = array<i64: 16, 128>}, {pipeline_mode = #tpu.pipeline_mode<synchronous>, transform_indices = @transform_1, window_bounds = array<i64: 128, 128>}, {pipeline_mode = #tpu.pipeline_mode<synchronous>, transform_indices = @transform_2, window_bounds = array<i64: 1, 128>}, {transform_indices = @transform_3, window_bounds = array<i64: 16, 128>}]} {
    %c0 = arith.constant 0 : index
    %c0_0 = arith.constant 0 : index
    %0 = vector.load %arg1[%c0, %c0_0] : memref<16x128xf32, #tpu.memory_space<vmem>>, vector<16x128xf32>
    %c0_1 = arith.constant 0 : index
    %c0_2 = arith.constant 0 : index
    %1 = vector.load %arg2[%c0_1, %c0_2] : memref<128x128xf32, #tpu.memory_space<vmem>>, vector<128x128xf32>
    %cst = arith.constant dense<0.000000e+00> : vector<16x128xf32>
    %2 = tpu.matmul %0, %1, %cst {dimension_numbers = #tpu.dot_dimension_numbers<[1], [1], [0], [0], [0, 0, 1, 0], [], []>} : vector<16x128xf32>, vector<128x128xf32>, vector<16x128xf32> -> vector<16x128xf32>
    %3 = arith.addf %0, %2 : vector<16x128xf32>
    %c0_3 = arith.constant 0 : index
    %c0_4 = arith.constant 0 : index
    %4 = vector.load %arg3[%c0_3, %c0_4] : memref<1x128xf32, #tpu.memory_space<vmem>>, vector<1x128xf32>
    %5 = vector.broadcast %4 : vector<1x128xf32> to vector<16x128xf32>
    %6 = arith.addf %3, %5 : vector<16x128xf32>
    %c0_5 = arith.constant 0 : index
    %c0_6 = arith.constant 0 : index
    %7 = vector.load %arg4[%c0_5, %c0_6] : memref<16x128xf32, #tpu.memory_space<vmem>>, vector<16x128xf32>
    tpu.vector_store %arg4[%c0_5, %c0_6], %6 {strides = array<i32>} : memref<16x128xf32, #tpu.memory_space<vmem>>, vector<16x128xf32>,
    return
  }
  func.func @transform_0(%arg0: i32) -> (i32, i32) {
    %c0_i32 = arith.constant 0 : i32
    %c0_i32_0 = arith.constant 0 : i32
    return %arg0, %c0_i32 : i32, i32
  }
  func.func @transform_1(%arg0: i32) -> (i32, i32) {
    %c0_i32 = arith.constant 0 : i32
    %c0_i32_0 = arith.constant 0 : i32
    %c0_i32_1 = arith.constant 0 : i32
    return %c0_i32, %c0_i32_0 : i32, i32
  }
  func.func @transform_2(%arg0: i32) -> (i32, i32) {
    %c0_i32 = arith.constant 0 : i32
    %c0_i32_0 = arith.constant 0 : i32
    %c0_i32_1 = arith.constant 0 : i32
    return %c0_i32, %c0_i32_0 : i32, i32
  }
  func.func @transform_3(%arg0: i32) -> (i32, i32) {
    %c0_i32 = arith.constant 0 : i32
    %c0_i32_0 = arith.constant 0 : i32
    return %arg0, %c0_i32 : i32, i32
  }
}

</mosaic_0001>

<llo_original>
// kernel: tpu_custom_call.1
$region0: #{tpu_custom_call.1}
  #allocation0 [shape = 'u32[]', space=smem, size = 0x4, offset = 0x4, fixed_abs, tag = 'smem constant byte address 0x4 - core index']
  #allocation1 [shape = 'u32[72,128]{1,0:T(1,128)}', space=vmem, size = 0x9000, scoped, tag = 'internal scratch']
  %s0 = inlined_call_operand.hbm [shape: f32[16,128], index: 0, kind: input, shape index: {}]
  %s1 = inlined_call_operand.hbm [shape: f32[128,128], index: 1, kind: input, shape index: {}]
  %s2 = inlined_call_operand.vmem [shape: f32[1,128], index: 2, kind: input, shape index: {}]
  %s3 = inlined_call_operand.hbm [shape: f32[16,128], index: 3, kind: output, shape index: {}]
  %s4 = sld [smem:[#allocation0]]
  $region30: #{tpu_custom_call.1} parent=0
    _
  %s6 = ssub.s32 1, %s4
  %s7 = scalar_select 0, %s6, %s4
  $region1: #{tpu_custom_call.1} parent=0
    #allocation2 [shape = 'u8[8192]{0}', space=vmem, size = 0x2000, scoped, tag = 'input window, operand 0, single buffered']
    #allocation3 [shape = 's32[1]{0}', space=sflag, size = 0x4, scoped, tag = 'scoped memory for tpu_custom_call.1']
    #allocation4 [shape = 's32[1]{0}', space=sflag, size = 0x4, scoped, tag = 'scoped memory for tpu_custom_call.1']
    #allocation5 [shape = 'u8[65536]{0}', space=vmem, size = 0x10000, scoped, tag = 'input window, operand 1, single buffered']
    #allocation6 [shape = 's32[1]{0}', space=sflag, size = 0x4, scoped, tag = 'scoped memory for tpu_custom_call.1']
    #allocation7 [shape = 'u8[8192]{0}', space=vmem, size = 0x2000, scoped, tag = 'output window, operand 0, single buffered']
    %8 = vsyncpa [#allocation3], 0
    %9 = vsyncpa [#allocation6], 0
    %10 = vsyncpa [#allocation4], 0
    // Predicated region
    $region2: #{tpu_custom_call.1} parent=1 // pred_check
      _
    $region3: #{tpu_custom_call.1} parent=1 // pred_check_branch
      %12 = sbr.rel (0) target = $region5
    $region4: #{tpu_custom_call.1} parent=1 // pred_region
      %14 = vsyncadd [#allocation3], 0
      %s15 = sshll.u32 %s0, 4
      %s16 = int_to_ptr.hbm [resolvable:$true] %s15
      %s17 = sshll.u32 [#allocation2], 4
      %s18 = int_to_ptr.vmem [resolvable:$true] %s17
      %23 = dma.hbm_to_vmem [thread:$0]  %s16, 256, %s18, [#allocation3], 128, 128, 8
    $region5: #{tpu_custom_call.1} parent=1 // pred_fallthru
      _
    // Predicated region
    $region6: #{tpu_custom_call.1} parent=1 // pred_check
      _
    $region7: #{tpu_custom_call.1} parent=1 // pred_check_branch
      %25 = sbr.rel (0) target = $region9
    $region8: #{tpu_custom_call.1} parent=1 // pred_region
      %27 = vsyncadd [#allocation6], 0
      %s28 = sshll.u32 %s1, 4
      %s29 = int_to_ptr.hbm [resolvable:$true] %s28
      %s30 = sshll.u32 [#allocation5], 4
      %s31 = int_to_ptr.vmem [resolvable:$true] %s30
      %36 = dma.hbm_to_vmem [thread:$0]  %s29, 2048, %s31, [#allocation6], 128, 128, 8
    $region9: #{tpu_custom_call.1} parent=1 // pred_fallthru
      _
    // Predicated region
    $region10: #{tpu_custom_call.1} parent=1 // pred_check
      _
    $region11: #{tpu_custom_call.1} parent=1 // pred_check_branch
      %38 = sbr.rel (0) target = $region13
    $region12: #{tpu_custom_call.1} parent=1 // pred_region
      _
    $region13: #{tpu_custom_call.1} parent=1 // pred_fallthru
      _
    // Predicated region
    $region14: #{tpu_custom_call.1} parent=1 // pred_check
      _
    $region15: #{tpu_custom_call.1} parent=1 // pred_check_branch
      %40 = sbr.rel (0) target = $region17
    $region16: #{tpu_custom_call.1} parent=1 // pred_region
      %42 = dma.done [#allocation3], 256
    $region17: #{tpu_custom_call.1} parent=1 // pred_fallthru
      _
    // Predicated region
    $region18: #{tpu_custom_call.1} parent=1 // pred_check
      _
    $region19: #{tpu_custom_call.1} parent=1 // pred_check_branch
      %44 = sbr.rel (0) target = $region21
    $region20: #{tpu_custom_call.1} parent=1 // pred_region
      %46 = dma.done [#allocation6], 2048
    $region21: #{tpu_custom_call.1} parent=1 // pred_fallthru
      _
    %v47 = vld [vmem:[#allocation2] sm:$0xff]
    %v48 = vld [vmem:[#allocation2 + $0x8] sm:$0xff]
    %v49 = vld [vmem:[#allocation5] sm:$0xff]
    %v50 = vld [vmem:[#allocation5 + $0x8] sm:$0xff]
    %v51 = vld [vmem:[#allocation5 + $0x10] sm:$0xff]
    %v52 = vld [vmem:[#allocation5 + $0x18] sm:$0xff]
    %v53 = vld [vmem:[#allocation5 + $0x20] sm:$0xff]
    %v54 = vld [vmem:[#allocation5 + $0x28] sm:$0xff]
    %v55 = vld [vmem:[#allocation5 + $0x30] sm:$0xff]
    %v56 = vld [vmem:[#allocation5 + $0x38] sm:$0xff]
    %v57 = vld [vmem:[#allocation5 + $0x40] sm:$0xff]
    %v58 = vld [vmem:[#allocation5 + $0x48] sm:$0xff]
    %v59 = vld [vmem:[#allocation5 + $0x50] sm:$0xff]
    %v60 = vld [vmem:[#allocation5 + $0x58] sm:$0xff]
    %v61 = vld [vmem:[#allocation5 + $0x60] sm:$0xff]
    %v62 = vld [vmem:[#allocation5 + $0x68] sm:$0xff]
    %v63 = vld [vmem:[#allocation5 + $0x70] sm:$0xff]
    %v64 = vld [vmem:[#allocation5 + $0x78] sm:$0xff]
    %65 = vmatpush.xpose.msra.mxu0 %v64
    %66 = vmatpush.xpose.msra.mxu0 %v63
    %67 = vmatpush.xpose.msra.mxu0 %v62
    %68 = vmatpush.xpose.msra.mxu0 %v61
    %69 = vmatpush.xpose.msra.mxu0 %v60
    %70 = vmatpush.xpose.msra.mxu0 %v59
    %71 = vmatpush.xpose.msra.mxu0 %v58
    %72 = vmatpush.xpose.msra.mxu0 %v57
    %73 = vmatpush.xpose.msra.mxu0 %v56
    %74 = vmatpush.xpose.msra.mxu0 %v55
    %75 = vmatpush.xpose.msra.mxu0 %v54
    %76 = vmatpush.xpose.msra.mxu0 %v53
    %77 = vmatpush.xpose.msra.mxu0 %v52
    %78 = vmatpush.xpose.msra.mxu0 %v51
    %79 = vmatpush.xpose.msra.mxu0 %v50
    %80 = vmatpush.xpose.msra.mxu0 %v49
    %81 = vmatmul.f32.gmra.mxu0 %v47
    %v82 = vpop.f32.mrf.mxu0
    %v83 = vadd.f32 0.0, %v82
    %84 = vmatmul.f32.gmra.mxu0 %v48
    %v85 = vpop.f32.mrf.mxu0
    %v86 = vadd.f32 0.0, %v85
    %87 = vdwg.mxu0
    %v88 = vadd.f32 %v47, %v83
    %v89 = vadd.f32 %v48, %v86
    %v90 = vld [vmem:[%s2] sm:$0x1]
    %v92 = vperm.slane %v90, 0
    %v94 = vadd.f32 %v88, %v92
    %v95 = vadd.f32 %v89, %v92
    %96 = vst [vmem:[#allocation7] sm:$0xff] %v94
    %97 = vst [vmem:[#allocation7 + $0x8] sm:$0xff] %v95
    // Predicated region
    $region22: #{tpu_custom_call.1} parent=1 // pred_check
      _
    $region23: #{tpu_custom_call.1} parent=1 // pred_check_branch
      %99 = sbr.rel (0) target = $region25
    $region24: #{tpu_custom_call.1} parent=1 // pred_region
      %101 = vsyncadd [#allocation4], 0
      %s102 = sshll.u32 [#allocation7], 4
      %s103 = int_to_ptr.vmem [resolvable:$true] %s102
      %s104 = sshll.u32 %s3, 4
      %s105 = int_to_ptr.hbm [resolvable:$true] %s104
      %110 = dma.vmem_to_hbm [thread:$0]  %s103, 256, %s105, [#allocation4], 128, 128, 8
    $region25: #{tpu_custom_call.1} parent=1 // pred_fallthru
      _
    // Predicated region
    $region26: #{tpu_custom_call.1} parent=1 // pred_check
      _
    $region27: #{tpu_custom_call.1} parent=1 // pred_check_branch
      %112 = sbr.rel (0) target = $region29
    $region28: #{tpu_custom_call.1} parent=1 // pred_region
      %114 = dma.done [#allocation4], 256
    $region29: #{tpu_custom_call.1} parent=1 // pred_fallthru
      _
    %115 = vsyncpa [#allocation3], 1
    %116 = vsyncpa [#allocation6], 1
    %117 = vsyncpa [#allocation4], 1

</llo_original>
